<compile_context>
chip_gen: v6e
topology: v6e:2x2x1
jax: 0.10.0
libtpu: 0.0.40
codegen_flags: <defaults>
</compile_context>

<pallas_src>
from functools import partial

import jax
import jax.numpy as jnp
from jax.experimental import pallas as pl
from jax.experimental.pallas import tpu as pltpu

# Small-shape stand-ins for the full-scale module constants
# (full scale: channels=64, FPN sizes=(64,32,16,8,4), input 512x512).
MID = 64                       # `mid` in the PyTorch module
NUM_CLASSES = 10               # `num_classes` argument
CHANNELS = 8                   # stand-in for the 64 FPN channels
FPN_SIZES = (16, 8, 4, 2, 1)   # stand-in for (64, 32, 16, 8, 4)


def _folded_head_kernel(x_ref, w_ref, b_ref, o_ref):
    """One K-tile of  out = x_cat @ W_folded + b  with f32 accumulation.

    Grid = (k_steps,).  The output block index is constant, so o_ref stays
    resident in VMEM across the reduction axis and is accumulated in-place;
    the bias is added on the last step so the final result is written once.
    """
    k = pl.program_id(0)

    @pl.when(k == 0)
    def _():
        o_ref[...] = jnp.zeros_like(o_ref)

    o_ref[...] += jnp.dot(x_ref[...], w_ref[...],
                          preferred_element_type=jnp.float32)

    @pl.when(k == pl.num_programs(0) - 1)
    def _():
        o_ref[...] = o_ref[...] + b_ref[...]


@partial(jax.jit, static_argnames=("tk",))
def efficient_classification2_head(fpn_feats, w_fold, b_fold, *, tk=512):
    """fpn_feats: list of 5 NCHW arrays.
    w_fold: (K_pad, NUM_CLASSES) bf16 folded weight (K already padded to a
            multiple of tk by fold_params).
    b_fold: (1, NUM_CLASSES) f32 folded bias.
    At full scale use tk=32768.
    """
    B = fpn_feats[0].shape[0]
    # torch.flatten(t, start_dim=1) on NCHW -> (B, C*H*W), C-major ordering.
    flats = [f.reshape(f.shape[0], -1) for f in fpn_feats]
    x_cat = jnp.concatenate(flats, axis=1).astype(jnp.bfloat16)

    K = x_cat.shape[1]
    K_pad, n_out = w_fold.shape
    assert n_out == NUM_CLASSES and K_pad >= K and K_pad % tk == 0, \
        "w_fold must be prepped by fold_params with the same tk"
    k_steps = K_pad // tk

    # Only the (cheap, per-call) activation pad happens here; zero columns
    # contribute nothing to the accumulation.
    x_cat = jnp.pad(x_cat, ((0, 0), (0, K_pad - K)))
    bias = jnp.broadcast_to(b_fold.astype(jnp.float32), (B, NUM_CLASSES))

    out = pl.pallas_call(
        _folded_head_kernel,
        out_shape=jax.ShapeDtypeStruct((B, NUM_CLASSES), jnp.float32),
        grid=(k_steps,),
        in_specs=[
            # x tile: full batch rows (block == full dim, so B=2 is legal).
            pl.BlockSpec((B, tk), lambda k: (0, k)),
            # weight tile: (tk, NUM_CLASSES) streamed / double-buffered;
            # last dim == full array dim, so no 128-lane padding in HBM.
            pl.BlockSpec((tk, NUM_CLASSES), lambda k: (k, 0)),
            # bias: constant block index -> fetched once, resident.
            pl.BlockSpec((B, NUM_CLASSES), lambda k: (0, 0)),
        ],
        # Resident (B, NUM_CLASSES) accumulator, written back once at the end.
        out_specs=pl.BlockSpec((B, NUM_CLASSES), lambda k: (0, 0)),
        compiler_params=pltpu.CompilerParams(
            dimension_semantics=("arbitrary",),
            vmem_limit_bytes=32 * 1024 * 1024),
    )(x_cat, w_fold, bias)
    return out


def init_params(key):
    """Deterministic init matching nn.Linear shapes (weights pre-transposed)."""
    fc_in = [CHANNELS * s * s for s in FPN_SIZES]
    params = []
    for k_in in fc_in:
        kw, kb, key = jax.random.split(key, 3)
        scale = 1.0 / (k_in ** 0.5)
        w = jax.random.uniform(kw, (k_in, MID), jnp.float32, -scale, scale)
        b = jax.random.uniform(kb, (1, MID), jnp.float32, -scale, scale)
        params.append((w, b))
    kw, kb, key = jax.random.split(key, 3)
    scale = 1.0 / ((5 * MID) ** 0.5)
    wout = jax.random.uniform(kw, (5 * MID, NUM_CLASSES), jnp.float32,
                              -scale, scale)
    bout = jax.random.uniform(kb, (1, NUM_CLASSES), jnp.float32, -scale, scale)
    params.append((wout, bout))
    return params


def fold_params(params, *, tk):
    """One-time (offline) weight prep.

    Folds fc_out into the per-level weights:
        W'_l = W_l @ Wout[l*MID:(l+1)*MID]      (k_in_l, NUM_CLASSES)
        b'   = sum_l b_l @ Wout_slice + bout
    then concatenates along K, zero-pads K to a multiple of tk and casts to
    bf16.  Returns (w_fold (K_pad, NUM_CLASSES) bf16, b_fold (1, NUM_CLASSES)
    f32).  No lane padding is applied in HBM.
    """
    level_params, (wout, bout) = params[:5], params[5]
    w_cols = []
    b_fold = bout.astype(jnp.float32)
    for lvl, (w, b) in enumerate(level_params):
        wout_slice = wout[lvl * MID:(lvl + 1) * MID, :]   # (MID, NUM_CLASSES)
        w_cols.append(w @ wout_slice)                     # (k_in, NUM_CLASSES)
        b_fold = b_fold + b @ wout_slice
    w_fold = jnp.concatenate(w_cols, axis=0)              # (K_total, NUM_CLASSES)
    K = w_fold.shape[0]
    K_pad = ((K + tk - 1) // tk) * tk
    w_fold = jnp.pad(w_fold, ((0, K_pad - K), (0, 0)))    # zero rows: no-op in sum
    return w_fold.astype(jnp.bfloat16), b_fold


if __name__ == "__main__":
    key = jax.random.PRNGKey(0)
    keys = jax.random.split(key, 6)
    B = 2
    TK = 512   # toy-scale K tile (K_total=2728 -> K_pad=3072, 6 steps);
               # at full scale use TK=32768.

    # TODO(synk): the effdet `efficientdet_d0` backbone (conv/BiFPN stack) has
    # no clean single-kernel Pallas equivalent; its 5 FPN output maps are
    # synthesized here as deterministic stand-in inputs instead.
    fpn_feats = [
        jax.random.normal(keys[i], (B, CHANNELS, s, s), jnp.float32)
        for i, s in enumerate(FPN_SIZES)
    ]
    params = init_params(keys[5])
    w_fold, b_fold = fold_params(params, tk=TK)

    out = efficient_classification2_head(fpn_feats, w_fold, b_fold, tk=TK)
    out = jax.block_until_ready(out)
    assert out.shape == (B, NUM_CLASSES)

    # Pure-JAX f32 reference of the original (unfused) head for correctness.
    flats = [f.reshape(B, -1) for f in fpn_feats]
    cat = jnp.concatenate(
        [flats[i] @ params[i][0] + params[i][1] for i in range(5)], axis=1)
    ref = cat @ params[5][0] + params[5][1]
    # Tolerance accounts for bf16 activations/folded-weights (f32 MXU accum)
    # and the re-associated (tiled, folded) reduction vs. monolithic f32.
    assert jnp.allclose(out, ref, atol=2e-2, rtol=2e-2), "kernel/ref mismatch"

    print("KERNEL_OK")
</pallas_src>

<mosaic_0001>
module attributes {stable_mosaic.version = 11 : i64} {
  func.func @_folded_head_kernel(%arg0: i32, %arg1: memref<2x512xbf16, #tpu.memory_space<vmem>>, %arg2: memref<512x10xbf16, #tpu.memory_space<vmem>>, %arg3: memref<2x10xf32, #tpu.memory_space<vmem>>, %arg4: memref<2x10xf32, #tpu.memory_space<vmem>>) attributes {dimension_semantics = [#tpu.dimension_semantics<arbitrary>], iteration_bounds = array<i64: 6>, scalar_prefetch = 0 : i64, scratch_operands = 0 : i64, tpu.core_type = #tpu.core_type<tc>, window_params = [{transform_indices = @transform_0, window_bounds = array<i64: 2, 512>}, {transform_indices = @transform_1, window_bounds = array<i64: 512, 10>}, {pipeline_mode = #tpu.pipeline_mode<synchronous>, transform_indices = @transform_2, window_bounds = array<i64: 2, 10>}, {pipeline_mode = #tpu.pipeline_mode<synchronous>, transform_indices = @transform_3, window_bounds = array<i64: 2, 10>}]} {
    %c0_i32 = arith.constant 0 : i32
    %0 = arith.cmpi eq, %arg0, %c0_i32 : i32
    %1 = arith.extui %0 : i1 to i32
    %c0_i32_0 = arith.constant 0 : i32
    %2 = arith.cmpi ne, %1, %c0_i32_0 : i32
    scf.if %2 {
      %cst_9 = arith.constant 0.000000e+00 : f32
      %12 = vector.broadcast %cst_9 : f32 to vector<2x10xf32>
      %c0_10 = arith.constant 0 : index
      %c0_11 = arith.constant 0 : index
      %13 = vector.load %arg4[%c0_10, %c0_11] : memref<2x10xf32, #tpu.memory_space<vmem>>, vector<2x10xf32>
      tpu.vector_store %arg4[%c0_10, %c0_11], %12 {strides = array<i32>} : memref<2x10xf32, #tpu.memory_space<vmem>>, vector<2x10xf32>,
    } else {
    }
    %c0 = arith.constant 0 : index
    %c0_1 = arith.constant 0 : index
    %3 = vector.load %arg4[%c0, %c0_1] : memref<2x10xf32, #tpu.memory_space<vmem>>, vector<2x10xf32>
    %c0_2 = arith.constant 0 : index
    %c0_3 = arith.constant 0 : index
    %4 = vector.load %arg1[%c0_2, %c0_3] : memref<2x512xbf16, #tpu.memory_space<vmem>>, vector<2x512xbf16>
    %c0_4 = arith.constant 0 : index
    %c0_5 = arith.constant 0 : index
    %5 = vector.load %arg2[%c0_4, %c0_5] : memref<512x10xbf16, #tpu.memory_space<vmem>>, vector<512x10xbf16>
    %cst = arith.constant dense<0.000000e+00> : vector<2x10xf32>
    %6 = tpu.matmul %4, %5, %cst {dimension_numbers = #tpu.dot_dimension_numbers<[1], [0], [0], [1], [0, 0, 1, 1], [], []>} : vector<2x512xbf16>, vector<512x10xbf16>, vector<2x10xf32> -> vector<2x10xf32>
    %7 = arith.addf %3, %6 : vector<2x10xf32>
    %c0_6 = arith.constant 0 : index
    %c0_7 = arith.constant 0 : index
    %8 = vector.load %arg4[%c0_6, %c0_7] : memref<2x10xf32, #tpu.memory_space<vmem>>, vector<2x10xf32>
    tpu.vector_store %arg4[%c0_6, %c0_7], %7 {strides = array<i32>} : memref<2x10xf32, #tpu.memory_space<vmem>>, vector<2x10xf32>,
    %c5_i32 = arith.constant 5 : i32
    %9 = arith.cmpi eq, %arg0, %c5_i32 : i32
    %10 = arith.extui %9 : i1 to i32
    %c0_i32_8 = arith.constant 0 : i32
    %11 = arith.cmpi ne, %10, %c0_i32_8 : i32
    scf.if %11 {
      %c0_9 = arith.constant 0 : index
      %c0_10 = arith.constant 0 : index
      %12 = vector.load %arg4[%c0_9, %c0_10] : memref<2x10xf32, #tpu.memory_space<vmem>>, vector<2x10xf32>
      %c0_11 = arith.constant 0 : index
      %c0_12 = arith.constant 0 : index
      %13 = vector.load %arg3[%c0_11, %c0_12] : memref<2x10xf32, #tpu.memory_space<vmem>>, vector<2x10xf32>
      %14 = arith.addf %12, %13 : vector<2x10xf32>
      %c0_13 = arith.constant 0 : index
      %c0_14 = arith.constant 0 : index
      %15 = vector.load %arg4[%c0_13, %c0_14] : memref<2x10xf32, #tpu.memory_space<vmem>>, vector<2x10xf32>
      tpu.vector_store %arg4[%c0_13, %c0_14], %14 {strides = array<i32>} : memref<2x10xf32, #tpu.memory_space<vmem>>, vector<2x10xf32>,
    } else {
    }
    return
  }
  func.func @transform_0(%arg0: i32) -> (i32, i32) {
    %c0_i32 = arith.constant 0 : i32
    %c0_i32_0 = arith.constant 0 : i32
    return %c0_i32, %arg0 : i32, i32
  }
  func.func @transform_1(%arg0: i32) -> (i32, i32) {
    %c0_i32 = arith.constant 0 : i32
    %c0_i32_0 = arith.constant 0 : i32
    return %arg0, %c0_i32 : i32, i32
  }
  func.func @transform_2(%arg0: i32) -> (i32, i32) {
    %c0_i32 = arith.constant 0 : i32
    %c0_i32_0 = arith.constant 0 : i32
    %c0_i32_1 = arith.constant 0 : i32
    return %c0_i32, %c0_i32_0 : i32, i32
  }
  func.func @transform_3(%arg0: i32) -> (i32, i32) {
    %c0_i32 = arith.constant 0 : i32
    %c0_i32_0 = arith.constant 0 : i32
    %c0_i32_1 = arith.constant 0 : i32
    return %c0_i32, %c0_i32_0 : i32, i32
  }
}

</mosaic_0001>

<llo_original>
// kernel: efficient_classification2_head.1
$region0: #{efficient_classification2_head.1}
  #allocation0 [shape = 'u32[]', space=smem, size = 0x4, offset = 0x4, fixed_abs, tag = 'smem constant byte address 0x4 - core index']
  #allocation1 [shape = 'u32[144,128]{1,0:T(1,128)}', space=vmem, size = 0x12000, scoped, tag = 'internal scratch']
  %s0 = inlined_call_operand.vmem [shape: bf16[2,3072], index: 0, kind: input, shape index: {}]
  %s1 = inlined_call_operand.vmem [shape: bf16[3072,10], index: 1, kind: input, shape index: {}]
  %s2 = inlined_call_operand.vmem [shape: f32[2,10], index: 2, kind: input, shape index: {}]
  %s3 = inlined_call_operand.hbm [shape: f32[2,10], index: 3, kind: output, shape index: {}]
  %s4 = sld [smem:[#allocation0]]
  $region53: #{efficient_classification2_head.1} parent=0
    _
  %s6 = ssub.s32 1, %s4
  %s7 = scalar_select 0, %s6, %s4
  $region1: #{efficient_classification2_head.1} parent=0
    #allocation2 [shape = 'u8[1024]{0}', space=vmem, size = 0x400, scoped, tag = 'output window, operand 0, single buffered']
    #allocation3 [shape = 's32[2]{0}', space=sflag, size = 0x8, scoped, tag = 'scoped memory for efficient_classification2_head.1']
    %8 = vsyncpa [#allocation3], 0
    loop: start=0, step=1, limit=8
    $region2: #{efficient_classification2_head.1} parent=1 // loop_pre_header
      _
    $region3: #{efficient_classification2_head.1} parent=1 // loop_header
      %s10 = sphi 0, %s14
      %p11 = scmp.ge.s32.totalorder %s10, 8
      %s20 = sphi 0, %s22
      %s23 = sphi 0, %s20
      %s24 = sphi 0, %s23
      %s40 = sphi 0, %s24
      %s46 = sphi 0, %s48
      %s49 = sphi 0, %s46
      %s50 = sphi 0, %s49
      %s66 = sphi 0, %s50
      %s70 = sphi 0, %s70
      %s72 = sphi 0, %s70
      %s73 = sphi 0, %s72
      %s87 = sphi 0, %s73
      %s91 = sphi 0, %s91
      %s93 = sphi 0, %s91
      %s94 = sphi 0, %s93
      %s108 = sphi 0, %s94
    $region4: #{efficient_classification2_head.1} parent=1 // loop_header_branch
      %13 = sbr.rel (%p11) target = $region8
    $region5: #{efficient_classification2_head.1} parent=1 // loop_body
      %s15 = ssub.s32 %s10, 1
      %s16 = ssub.s32 %s10, 2
      %s17 = sadd.s32 %s10, 1
      %s18 = ssub.s32 %s10, %s17
      %p19 = scmp.eq.s32.totalorder %s18, 0
      %s21 = sadd.s32 %s20, 1
      %s22 = scalar_select %p19, %s20, %s21
      %p25 = pneg %p19
      %p26 = scmp.eq.s32.totalorder %s10, 5
      %p27 = por %p25, %p26
      %p28 = scmp.ne.s32.totalorder %s20, %s23
      %p29 = scmp.eq.s32.totalorder %s10, 0
      %p30 = por %p28, %p29
      %p31 = scmp.ne.s32.totalorder %s20, %s23
      %p32 = scmp.eq.s32.totalorder %s15, 5
      %p33 = por %p31, %p32
      %p34 = scmp.ne.s32.totalorder %s23, %s24
      %p35 = scmp.eq.s32.totalorder %s15, 0
      %p36 = por %p34, %p35
      %p37 = scmp.ne.s32.totalorder %s23, %s24
      %p38 = scmp.eq.s32.totalorder %s16, 5
      %p39 = por %p37, %p38
      %p41 = scmp.ne.s32.totalorder %s24, %s40
      %p42 = scmp.eq.s32.totalorder %s16, 0
      %p43 = por %p41, %p42
      %s44 = ssub.s32 %s10, %s17
      %p45 = scmp.eq.s32.totalorder %s44, 0
      %s47 = sadd.s32 %s46, 1
      %s48 = scalar_select %p45, %s46, %s47
      %p51 = pneg %p45
      %p52 = scmp.eq.s32.totalorder %s10, 5
      %p53 = por %p51, %p52
      %p54 = scmp.ne.s32.totalorder %s46, %s49
      %p55 = scmp.eq.s32.totalorder %s10, 0
      %p56 = por %p54, %p55
      %p57 = scmp.ne.s32.totalorder %s46, %s49
      %p58 = scmp.eq.s32.totalorder %s15, 5
      %p59 = por %p57, %p58
      %p60 = scmp.ne.s32.totalorder %s49, %s50
      %p61 = scmp.eq.s32.totalorder %s15, 0
      %p62 = por %p60, %p61
      %p63 = scmp.ne.s32.totalorder %s49, %s50
      %p64 = scmp.eq.s32.totalorder %s16, 5
      %p65 = por %p63, %p64
      %p67 = scmp.ne.s32.totalorder %s50, %s66
      %p68 = scmp.eq.s32.totalorder %s16, 0
      %p69 = por %p67, %p68
      %s71 = sadd.s32 %s70, 1
      %p74 = scmp.eq.s32.totalorder %s10, 5
      %p75 = scmp.ne.s32.totalorder %s70, %s72
      %p76 = scmp.eq.s32.totalorder %s10, 0
      %p77 = por %p75, %p76
      %p78 = scmp.ne.s32.totalorder %s70, %s72
      %p79 = scmp.eq.s32.totalorder %s15, 5
      %p80 = por %p78, %p79
      %p81 = scmp.ne.s32.totalorder %s72, %s73
      %p82 = scmp.eq.s32.totalorder %s15, 0
      %p83 = por %p81, %p82
      %p84 = scmp.ne.s32.totalorder %s72, %s73
      %p85 = scmp.eq.s32.totalorder %s16, 5
      %p86 = por %p84, %p85
      %p88 = scmp.ne.s32.totalorder %s73, %s87
      %p89 = scmp.eq.s32.totalorder %s16, 0
      %p90 = por %p88, %p89
      %s92 = sadd.s32 %s91, 1
      %p95 = scmp.eq.s32.totalorder %s10, 5
      %p96 = scmp.ne.s32.totalorder %s91, %s93
      %p97 = scmp.eq.s32.totalorder %s10, 0
      %p98 = por %p96, %p97
      %p99 = scmp.ne.s32.totalorder %s91, %s93
      %p100 = scmp.eq.s32.totalorder %s15, 5
      %p101 = por %p99, %p100
      %p102 = scmp.ne.s32.totalorder %s93, %s94
      %p103 = scmp.eq.s32.totalorder %s15, 0
      %p104 = por %p102, %p103
      %p105 = scmp.ne.s32.totalorder %s93, %s94
      %p106 = scmp.eq.s32.totalorder %s16, 5
      %p107 = por %p105, %p106
      %p109 = scmp.ne.s32.totalorder %s94, %s108
      %p110 = scmp.eq.s32.totalorder %s16, 0
      %p111 = por %p109, %p110
      %p112 = scmp.le.s32.totalorder 1, %s10
      %p113 = scmp.lt.s32.totalorder %s10, 7
      %p114 = pnand %p112, %p113
      %p115 = pneg %p114
      // Predicated region
      $region9: #{efficient_classification2_head.1} parent=5 // pred_check
        _
      $region10: #{efficient_classification2_head.1} parent=5 // pred_check_branch
        %117 = sbr.rel (%p114) target = $region12
      $region11: #{efficient_classification2_head.1} parent=5 // pred_region
        %s118 = ssub.s32 %s10, 1
        // Predicated region
        $region13: #{efficient_classification2_head.1} parent=11 // pred_check
          %p119 = pneg %p83
        $region14: #{efficient_classification2_head.1} parent=11 // pred_check_branch
          %121 = sbr.rel (%p119) target = $region16
        $region15: #{efficient_classification2_head.1} parent=11 // pred_region
          _
        $region16: #{efficient_classification2_head.1} parent=11 // pred_fallthru
          _
      $region12: #{efficient_classification2_head.1} parent=5 // pred_fallthru
        _
      %p122 = scmp.lt.s32.totalorder %s10, 6
      // Predicated region
      $region17: #{efficient_classification2_head.1} parent=5 // pred_check
        %p123 = pneg %p122
      $region18: #{efficient_classification2_head.1} parent=5 // pred_check_branch
        %125 = sbr.rel (%p123) target = $region20
      $region19: #{efficient_classification2_head.1} parent=5 // pred_region
        // Predicated region
        $region21: #{efficient_classification2_head.1} parent=19 // pred_check
          %p126 = pneg %p30
        $region22: #{efficient_classification2_head.1} parent=19 // pred_check_branch
          %128 = sbr.rel (%p126) target = $region24
        $region23: #{efficient_classification2_head.1} parent=19 // pred_region
          %s129 = smul.u32 4, %s10
          %p130 = scmp.lt.s32.totalorder %s129, 23
          %s131 = scalar_select %p130, %s129, 23
          %s132 = scalar_lea.vmem %s0, %s131
          %s133 = smul.u32 4, %s10
        $region24: #{efficient_classification2_head.1} parent=19 // pred_fallthru
          _
        // Predicated region
        $region25: #{efficient_classification2_head.1} parent=19 // pred_check
          %p134 = pneg %p56
        $region26: #{efficient_classification2_head.1} parent=19 // pred_check_branch
          %136 = sbr.rel (%p134) target = $region28
        $region27: #{efficient_classification2_head.1} parent=19 // pred_region
          %s137 = smul.u32 64, %s10
          %p138 = scmp.lt.s32.totalorder %s137, 383
          %s139 = scalar_select %p138, %s137, 383
          %s140 = smul.addr %s139, 4
          %s141 = scalar_lea.vmem %s1, %s140
          %s142 = smul.u32 64, %s10
        $region28: #{efficient_classification2_head.1} parent=19 // pred_fallthru
          _
      $region20: #{efficient_classification2_head.1} parent=5 // pred_fallthru
        _
      %p143 = scmp.le.s32.totalorder 1, %s10
      %p144 = scmp.lt.s32.totalorder %s10, 7
      %p145 = pnand %p143, %p144
      %p146 = pneg %p145
      // Predicated region
      $region29: #{efficient_classification2_head.1} parent=5 // pred_check
        _
      $region30: #{efficient_classification2_head.1} parent=5 // pred_check_branch
        %148 = sbr.rel (%p145) target = $region32
      $region31: #{efficient_classification2_head.1} parent=5 // pred_region
        %s149 = ssub.s32 %s10, 1
        %s150 = smul.u32 4, %s15
        %p151 = scmp.lt.s32.totalorder %s150, 23
        %s152 = scalar_select %p151, %s150, 23
        %s153 = scalar_lea.vmem %s0, %s152
        %p154 = pneg %p36
        %p155 = pneg %p33
        %s156 = smul.u32 64, %s15
        %p157 = scmp.lt.s32.totalorder %s156, 383
        %s158 = scalar_select %p157, %s156, 383
        %s159 = smul.addr %s158, 4
        %s160 = scalar_lea.vmem %s1, %s159
        %p161 = pneg %p62
        %p162 = pneg %p59
        %p163 = pneg %p83
        %p164 = pneg %p80
        %p165 = pneg %p104
        %p166 = pneg %p101
        %s167 = smul.u32 4, %s15
        %p168 = scmp.lt.s32.totalorder %s167, 23
        %s169 = scalar_select %p168, %s167, 23
        %s170 = scalar_lea.vmem %s0, %s169
        %s171 = smul.u32 4, %s15
        %s172 = smul.u32 64, %s15
        %p173 = scmp.lt.s32.totalorder %s172, 383
        %s174 = scalar_select %p173, %s172, 383
        %s175 = smul.addr %s174, 4
        %s176 = scalar_lea.vmem %s1, %s175
        %s177 = smul.u32 64, %s15
        %p179 = scmp.eq.s32.totalorder %s15, 0
        // Predicated region
        $region33: #{efficient_classification2_head.1} parent=31 // pred_check
          %p180 = pneg %p179
        $region34: #{efficient_classification2_head.1} parent=31 // pred_check_branch
          %182 = sbr.rel (%p180) target = $region36
        $region35: #{efficient_classification2_head.1} parent=31 // pred_region
          %vm183 = vcmask 74752
          %184 = vst.msk [vmem:[#allocation2] sm:$0x3] %vm183, 0.0
        $region36: #{efficient_classification2_head.1} parent=31 // pred_fallthru
          _
        %v185 = vld [vmem:[#allocation2] sm:$0x3]
        %v186 = vld [vmem:[%s170] sm:$0xf]
        %v187 = vld [vmem:[%s176] sm:$0xf]
        %v188 = vld [vmem:[%s176 + $0x4] sm:$0xf]
        %v189 = vld [vmem:[%s176 + $0x8] sm:$0xf]
        %v190 = vld [vmem:[%s176 + $0xc] sm:$0xf]
        %v191 = vld [vmem:[%s176 + $0x10] sm:$0xf]
        %v192 = vld [vmem:[%s176 + $0x14] sm:$0xf]
        %v193 = vld [vmem:[%s176 + $0x18] sm:$0xf]
        %v194 = vld [vmem:[%s176 + $0x1c] sm:$0xf]
        %v195 = vld [vmem:[%s176 + $0x20] sm:$0xf]
        %v196 = vld [vmem:[%s176 + $0x24] sm:$0xf]
        %v197 = vld [vmem:[%s176 + $0x28] sm:$0xf]
        %v198 = vld [vmem:[%s176 + $0x2c] sm:$0xf]
        %v199 = vld [vmem:[%s176 + $0x30] sm:$0xf]
        %v200 = vld [vmem:[%s176 + $0x34] sm:$0xf]
        %v201 = vld [vmem:[%s176 + $0x38] sm:$0xf]
        %v202 = vld [vmem:[%s176 + $0x3c] sm:$0xf]
        %v203 = vld [vmem:[%s176 + $0x40] sm:$0xf]
        %v204 = vld [vmem:[%s176 + $0x44] sm:$0xf]
        %v205 = vld [vmem:[%s176 + $0x48] sm:$0xf]
        %v206 = vld [vmem:[%s176 + $0x4c] sm:$0xf]
        %v207 = vld [vmem:[%s176 + $0x50] sm:$0xf]
        %v208 = vld [vmem:[%s176 + $0x54] sm:$0xf]
        %v209 = vld [vmem:[%s176 + $0x58] sm:$0xf]
        %v210 = vld [vmem:[%s176 + $0x5c] sm:$0xf]
        %v211 = vld [vmem:[%s176 + $0x60] sm:$0xf]
        %v212 = vld [vmem:[%s176 + $0x64] sm:$0xf]
        %v213 = vld [vmem:[%s176 + $0x68] sm:$0xf]
        %v214 = vld [vmem:[%s176 + $0x6c] sm:$0xf]
        %v215 = vld [vmem:[%s176 + $0x70] sm:$0xf]
        %v216 = vld [vmem:[%s176 + $0x74] sm:$0xf]
        %v217 = vld [vmem:[%s176 + $0x78] sm:$0xf]
        %v218 = vld [vmem:[%s176 + $0x7c] sm:$0xf]
        %v219 = vld [vmem:[%s176 + $0x80] sm:$0xf]
        %v220 = vld [vmem:[%s176 + $0x84] sm:$0xf]
        %v221 = vld [vmem:[%s176 + $0x88] sm:$0xf]
        %v222 = vld [vmem:[%s176 + $0x8c] sm:$0xf]
        %v223 = vld [vmem:[%s176 + $0x90] sm:$0xf]
        %v224 = vld [vmem:[%s176 + $0x94] sm:$0xf]
        %v225 = vld [vmem:[%s176 + $0x98] sm:$0xf]
        %v226 = vld [vmem:[%s176 + $0x9c] sm:$0xf]
        %v227 = vld [vmem:[%s176 + $0xa0] sm:$0xf]
        %v228 = vld [vmem:[%s176 + $0xa4] sm:$0xf]
        %v229 = vld [vmem:[%s176 + $0xa8] sm:$0xf]
        %v230 = vld [vmem:[%s176 + $0xac] sm:$0xf]
        %v231 = vld [vmem:[%s176 + $0xb0] sm:$0xf]
        %v232 = vld [vmem:[%s176 + $0xb4] sm:$0xf]
        %v233 = vld [vmem:[%s176 + $0xb8] sm:$0xf]
        %v234 = vld [vmem:[%s176 + $0xbc] sm:$0xf]
        %v235 = vld [vmem:[%s176 + $0xc0] sm:$0xf]
        %v236 = vld [vmem:[%s176 + $0xc4] sm:$0xf]
        %v237 = vld [vmem:[%s176 + $0xc8] sm:$0xf]
        %v238 = vld [vmem:[%s176 + $0xcc] sm:$0xf]
        %v239 = vld [vmem:[%s176 + $0xd0] sm:$0xf]
        %v240 = vld [vmem:[%s176 + $0xd4] sm:$0xf]
        %v241 = vld [vmem:[%s176 + $0xd8] sm:$0xf]
        %v242 = vld [vmem:[%s176 + $0xdc] sm:$0xf]
        %v243 = vld [vmem:[%s176 + $0xe0] sm:$0xf]
        %v244 = vld [vmem:[%s176 + $0xe4] sm:$0xf]
        %v245 = vld [vmem:[%s176 + $0xe8] sm:$0xf]
        %v246 = vld [vmem:[%s176 + $0xec] sm:$0xf]
        %v247 = vld [vmem:[%s176 + $0xf0] sm:$0xf]
        %v248 = vld [vmem:[%s176 + $0xf4] sm:$0xf]
        %v249 = vld [vmem:[%s176 + $0xf8] sm:$0xf]
        %v250 = vld [vmem:[%s176 + $0xfc] sm:$0xf]
        %v253 = vunpack.c.l.s4 1966171168
        %v254 = vunpack.c.0.s8 %v253
        %v255 = vlaneseq
        %v256 = vshrl.u32 %v255, 7
        %v257 = vsub.s32 %v254, %v256
        %v258 = vrot.slane %v186, %v257
        %v259 = vcombine.high %v258, %v258
        %v261 = vunpack.c.l.s4 1966171168
        %v262 = vunpack.c.0.s8 %v261
        %v263 = vlaneseq
        %v264 = vshrl.u32 %v263, 7
        %v265 = vsub.s32 %v262, %v264
        %v266 = vrot.slane %v258, %v265
        %v268 = vunpack.c.l.s4 1966171168
        %v269 = vunpack.c.0.s8 %v268
        %v270 = vlaneseq
        %v271 = vshrl.u32 %v270, 7
        %v272 = vsub.s32 %v269, %v271
        %v273 = vrot.slane %v259, %v272
        %v274 = vcombine.high %v266, %v266
        %v275 = vcombine.high %v273, %v273
        %v344 = vunpack.c.l.b16 %v187
        %v345 = vunpack.c.l.b16 %v188
        %v346 = vunpack.c.l.b16 %v189
        %v347 = vunpack.c.l.b16 %v190
        %v348 = vunpack.c.l.b16 %v191
        %v349 = vunpack.c.l.b16 %v192
        %v350 = vunpack.c.l.b16 %v193
        %v351 = vunpack.c.l.b16 %v194
        %v352 = vunpack.c.l.b16 %v195
        %v353 = vunpack.c.l.b16 %v196
        %v354 = vunpack.c.l.b16 %v197
        %v355 = vunpack.c.l.b16 %v198
        %v356 = vunpack.c.l.b16 %v199
        %v357 = vunpack.c.l.b16 %v200
        %v358 = vunpack.c.l.b16 %v201
        %v359 = vunpack.c.l.b16 %v202
        %v360 = vunpack.c.l.b16 %v203
        %v361 = vunpack.c.l.b16 %v204
        %v362 = vunpack.c.l.b16 %v205
        %v363 = vunpack.c.l.b16 %v206
        %v364 = vunpack.c.l.b16 %v207
        %v365 = vunpack.c.l.b16 %v208
        %v366 = vunpack.c.l.b16 %v209
        %v367 = vunpack.c.l.b16 %v210
        %v368 = vunpack.c.l.b16 %v211
        %v369 = vunpack.c.l.b16 %v212
        %v370 = vunpack.c.l.b16 %v213
        %v371 = vunpack.c.l.b16 %v214
        %v372 = vunpack.c.l.b16 %v215
        %v373 = vunpack.c.l.b16 %v216
        %v374 = vunpack.c.l.b16 %v217
        %v375 = vunpack.c.l.b16 %v218
        %v376 = vunpack.c.l.b16 %v219
        %v377 = vunpack.c.l.b16 %v220
        %v378 = vunpack.c.l.b16 %v221
        %v379 = vunpack.c.l.b16 %v222
        %v380 = vunpack.c.l.b16 %v223
        %v381 = vunpack.c.l.b16 %v224
        %v382 = vunpack.c.l.b16 %v225
        %v383 = vunpack.c.l.b16 %v226
        %v384 = vunpack.c.l.b16 %v227
        %v385 = vunpack.c.l.b16 %v228
        %v386 = vunpack.c.l.b16 %v229
        %v387 = vunpack.c.l.b16 %v230
        %v388 = vunpack.c.l.b16 %v231
        %v389 = vunpack.c.l.b16 %v232
        %v390 = vunpack.c.l.b16 %v233
        %v391 = vunpack.c.l.b16 %v234
        %v392 = vunpack.c.l.b16 %v235
        %v393 = vunpack.c.l.b16 %v236
        %v394 = vunpack.c.l.b16 %v237
        %v395 = vunpack.c.l.b16 %v238
        %v396 = vunpack.c.l.b16 %v239
        %v397 = vunpack.c.l.b16 %v240
        %v398 = vunpack.c.l.b16 %v241
        %v399 = vunpack.c.l.b16 %v242
        %v400 = vunpack.c.l.b16 %v243
        %v401 = vunpack.c.l.b16 %v244
        %v402 = vunpack.c.l.b16 %v245
        %v403 = vunpack.c.l.b16 %v246
        %v404 = vunpack.c.l.b16 %v247
        %v405 = vunpack.c.l.b16 %v248
        %v406 = vunpack.c.l.b16 %v249
        %v407 = vunpack.c.l.b16 %v250
        %v408 = vpack.c.b16 %v345, %v344
        %v409 = vpack.c.b16 %v347, %v346
        %v410 = vpack.c.b16 %v349, %v348
        %v411 = vpack.c.b16 %v351, %v350
        %v412 = vpack.c.b16 %v353, %v352
        %v413 = vpack.c.b16 %v355, %v354
        %v414 = vpack.c.b16 %v357, %v356
        %v415 = vpack.c.b16 %v359, %v358
        %v416 = vpack.c.b16 %v361, %v360
        %v417 = vpack.c.b16 %v363, %v362
        %v418 = vpack.c.b16 %v365, %v364
        %v419 = vpack.c.b16 %v367, %v366
        %v420 = vpack.c.b16 %v369, %v368
        %v421 = vpack.c.b16 %v371, %v370
        %v422 = vpack.c.b16 %v373, %v372
        %v423 = vpack.c.b16 %v375, %v374
        %v424 = vpack.c.b16 %v377, %v376
        %v425 = vpack.c.b16 %v379, %v378
        %v426 = vpack.c.b16 %v381, %v380
        %v427 = vpack.c.b16 %v383, %v382
        %v428 = vpack.c.b16 %v385, %v384
        %v429 = vpack.c.b16 %v387, %v386
        %v430 = vpack.c.b16 %v389, %v388
        %v431 = vpack.c.b16 %v391, %v390
        %v432 = vpack.c.b16 %v393, %v392
        %v433 = vpack.c.b16 %v395, %v394
        %v434 = vpack.c.b16 %v397, %v396
        %v435 = vpack.c.b16 %v399, %v398
        %v436 = vpack.c.b16 %v401, %v400
        %v437 = vpack.c.b16 %v403, %v402
        %v438 = vpack.c.b16 %v405, %v404
        %v439 = vpack.c.b16 %v407, %v406
        %472 = vmatprep.subr.bf16.mxu0 0
        %473 = vmatpush1.bf16.msra.mxu0 %v415
        %474 = vmatprep.subr.bf16.mxu0 0
        %475 = vmatpush1.bf16.msra.mxu0 %v414
        %476 = vmatprep.subr.bf16.mxu0 0
        %477 = vmatpush1.bf16.msra.mxu0 %v413
        %478 = vmatprep.subr.bf16.mxu0 0
        %479 = vmatpush1.bf16.msra.mxu0 %v412
        %480 = vmatprep.subr.bf16.mxu0 0
        %481 = vmatpush1.bf16.msra.mxu0 %v411
        %482 = vmatprep.subr.bf16.mxu0 0
        %483 = vmatpush1.bf16.msra.mxu0 %v410
        %484 = vmatprep.subr.bf16.mxu0 0
        %485 = vmatpush1.bf16.msra.mxu0 %v409
        %486 = vmatprep.subr.bf16.mxu0 0
        %487 = vmatpush1.bf16.msra.mxu0 %v408
        %488 = vmatprep.subr.bf16.mxu0 0
        %489 = vmatpush2.bf16.msra.mxu0 %v423
        %490 = vmatprep.subr.bf16.mxu0 0
        %491 = vmatpush2.bf16.msra.mxu0 %v422
        %492 = vmatprep.subr.bf16.mxu0 0
        %493 = vmatpush2.bf16.msra.mxu0 %v421
        %494 = vmatprep.subr.bf16.mxu0 0
        %495 = vmatpush2.bf16.msra.mxu0 %v420
        %496 = vmatprep.subr.bf16.mxu0 0
        %497 = vmatpush2.bf16.msra.mxu0 %v419
        %498 = vmatprep.subr.bf16.mxu0 0
        %499 = vmatpush2.bf16.msra.mxu0 %v418
        %500 = vmatprep.subr.bf16.mxu0 0
        %501 = vmatpush2.bf16.msra.mxu0 %v417
        %502 = vmatprep.subr.bf16.mxu0 0
        %503 = vmatpush2.bf16.msra.mxu0 %v416
        %504 = vmatprep.mubr.bf16.mxu0 %v273
        %505 = vmatmul.mubr.bf16.gmra.mxu0 %v266
        %v506 = vpop.f32.mrf.mxu0
        %v507 = vadd.f32 0.0, %v506
        %v508 = vpop.f32.mrf.mxu0
        %v509 = vpop.f32.mrf.mxu0
        %v510 = vpop.f32.mrf.mxu0
        %511 = vdwg.mxu0
        %512 = vmatprep.subr.bf16.mxu0 0
        %513 = vmatpush1.bf16.msra.mxu0 %v431
        %514 = vmatprep.subr.bf16.mxu0 0
        %515 = vmatpush1.bf16.msra.mxu0 %v430
        %516 = vmatprep.subr.bf16.mxu0 0
        %517 = vmatpush1.bf16.msra.mxu0 %v429
        %518 = vmatprep.subr.bf16.mxu0 0
        %519 = vmatpush1.bf16.msra.mxu0 %v428
        %520 = vmatprep.subr.bf16.mxu0 0
        %521 = vmatpush1.bf16.msra.mxu0 %v427
        %522 = vmatprep.subr.bf16.mxu0 0
        %523 = vmatpush1.bf16.msra.mxu0 %v426
        %524 = vmatprep.subr.bf16.mxu0 0
        %525 = vmatpush1.bf16.msra.mxu0 %v425
        %526 = vmatprep.subr.bf16.mxu0 0
        %527 = vmatpush1.bf16.msra.mxu0 %v424
        %528 = vmatprep.subr.bf16.mxu0 0
        %529 = vmatpush2.bf16.msra.mxu0 %v439
        %530 = vmatprep.subr.bf16.mxu0 0
        %531 = vmatpush2.bf16.msra.mxu0 %v438
        %532 = vmatprep.subr.bf16.mxu0 0
        %533 = vmatpush2.bf16.msra.mxu0 %v437
        %534 = vmatprep.subr.bf16.mxu0 0
        %535 = vmatpush2.bf16.msra.mxu0 %v436
        %536 = vmatprep.subr.bf16.mxu0 0
        %537 = vmatpush2.bf16.msra.mxu0 %v435
        %538 = vmatprep.subr.bf16.mxu0 0
        %539 = vmatpush2.bf16.msra.mxu0 %v434
        %540 = vmatprep.subr.bf16.mxu0 0
        %541 = vmatpush2.bf16.msra.mxu0 %v433
        %542 = vmatprep.subr.bf16.mxu0 0
        %543 = vmatpush2.bf16.msra.mxu0 %v432
        %544 = vmatprep.mubr.bf16.mxu0 %v275
        %545 = vmatmul.mubr.bf16.gmra.mxu0 %v274
        %v546 = vpop.f32.mrf.mxu0
        %v547 = vadd.f32 %v507, %v546
        %v548 = vpop.f32.mrf.mxu0
        %v549 = vpop.f32.mrf.mxu0
        %v550 = vpop.f32.mrf.mxu0
        %551 = vdwg.mxu0
        %v552 = vadd.f32 %v185, %v547
        %vm553 = vcmask 74752
        %554 = vst.msk [vmem:[#allocation2] sm:$0x3] %vm553, %v552
        %p555 = scmp.eq.s32.totalorder %s15, 5
        // Predicated region
        $region37: #{efficient_classification2_head.1} parent=31 // pred_check
          %p556 = pneg %p555
        $region38: #{efficient_classification2_head.1} parent=31 // pred_check_branch
          %558 = sbr.rel (%p556) target = $region40
        $region39: #{efficient_classification2_head.1} parent=31 // pred_region
          %v559 = vld [vmem:[#allocation2] sm:$0x3]
          %v560 = vld [vmem:[%s2] sm:$0x3]
          %v561 = vadd.f32 %v559, %v560
          %562 = vst.msk [vmem:[#allocation2] sm:$0x3] %vm553, %v561
        $region40: #{efficient_classification2_head.1} parent=31 // pred_fallthru
          _
        // Predicated region
        $region41: #{efficient_classification2_head.1} parent=31 // pred_check
          %p563 = pneg %p101
        $region42: #{efficient_classification2_head.1} parent=31 // pred_check_branch
          %565 = sbr.rel (%p563) target = $region44
        $region43: #{efficient_classification2_head.1} parent=31 // pred_region
          %s567 = ssub.s32 32, 32
          %568 = vsyncadd [#allocation3], %s567
          %s570 = sshll.u32 [#allocation2], 4
          %s571 = int_to_ptr.vmem [resolvable:$true] %s570
          %573 = dma.vmem_to_hbm [thread:$0]  %s571, 32, %s3, [#allocation3]
        $region44: #{efficient_classification2_head.1} parent=31 // pred_fallthru
          _
        // Predicated region
        $region45: #{efficient_classification2_head.1} parent=31 // pred_check
          %p574 = pneg %p101
        $region46: #{efficient_classification2_head.1} parent=31 // pred_check_branch
          %576 = sbr.rel (%p574) target = $region48
        $region47: #{efficient_classification2_head.1} parent=31 // pred_region
          %577 = dma.done [#allocation3], 32
        $region48: #{efficient_classification2_head.1} parent=31 // pred_fallthru
          _
      $region32: #{efficient_classification2_head.1} parent=5 // pred_fallthru
        _
      %p578 = scmp.le.s32.totalorder 2, %s10
      // Predicated region
      $region49: #{efficient_classification2_head.1} parent=5 // pred_check
        %p579 = pneg %p578
      $region50: #{efficient_classification2_head.1} parent=5 // pred_check_branch
        %581 = sbr.rel (%p579) target = $region52
      $region51: #{efficient_classification2_head.1} parent=5 // pred_region
        %s582 = ssub.s32 %s10, 2
      $region52: #{efficient_classification2_head.1} parent=5 // pred_fallthru
        _
    $region6: #{efficient_classification2_head.1} parent=1 // loop_footer
      %s14 = sadd.s32 1, %s10
    $region7: #{efficient_classification2_head.1} parent=1 // loop_footer_branch
      %9 = sbr.rel target = $region3
    $region8: #{efficient_classification2_head.1} parent=1 // loop_exit
      _
    %583 = vsyncpa [#allocation3], 1
    %s584 = scalar_lea.sflag [#allocation3], 1
    %585 = vsyncpa %s584, 1

</llo_original>
